<compile_context>
chip_gen: v6e
topology: v6e:2x2x1
jax: 0.10.0
libtpu: 0.0.40
codegen_flags: <defaults>
</compile_context>

<pallas_src>
import jax
import jax.numpy as jnp
from jax.experimental import pallas as pl
from jax.experimental.pallas import tpu as pltpu

STATE_SIZE = 4      # CartPole observation dim
ACTION_SIZE = 2     # CartPole-v0 action space
HIDDEN = 512
OUT_PAD = 128       # lane-dense padded output width (slice back to ACTION_SIZE)
MAX_TILE_M = 1024   # training-path batch tile cap
SMALL_BATCH = 32    # <= this -> latency-critical acting path (single small tile)


def _round_up(n, m):
    return ((n + m - 1) // m) * m


def _choose_tiling(B):
    """Pick (tile_m, n_tiles) from the static batch size."""
    if B <= SMALL_BATCH:
        # Acting path: one tile, padded only to the 16-row bf16 sublane minimum.
        tile_m = max(16, _round_up(B, 16))
        return tile_m, 1
    # Training path: as large as possible (amortize per-grid-step overhead) while
    # keeping >= 2 grid steps so the batch axis can shard over v7x's 2 TensorCores.
    half = -(-B // 2)
    tile_m = min(MAX_TILE_M, _round_up(half, 16))
    n_tiles = -(-B // tile_m)
    return tile_m, n_tiles


def dqn_kernel(x_ref, w1_ref, b1_ref, w2_ref, b2_ref, w3_ref, b3_ref, o_ref):
    # One batch tile per grid step. Weights/biases are grid-invariant (VMEM
    # resident); three MXU matmuls with f32 accumulation, bias+ReLU on the VPU,
    # ReLU fused directly into a bf16 cast (no f32 intermediates to scratch).
    x = x_ref[...].astype(jnp.bfloat16)

    h1 = jnp.dot(x, w1_ref[...], preferred_element_type=jnp.float32) + b1_ref[...]
    h1 = jnp.maximum(h1, 0.0).astype(jnp.bfloat16)

    h2 = jnp.dot(h1, w2_ref[...], preferred_element_type=jnp.float32) + b2_ref[...]
    h2 = jnp.maximum(h2, 0.0).astype(jnp.bfloat16)

    out = jnp.dot(h2, w3_ref[...], preferred_element_type=jnp.float32) + b3_ref[...]
    o_ref[...] = out.astype(o_ref.dtype)   # bf16 writeback (halves output HBM)


def dqn_forward(x, w1, b1, w2, b2, w3, b3):
    """Q(x) for a batch of states. Call from inside a jit so the final slice/cast
    fuses into the consumer instead of re-reading the padded output buffer."""
    B = x.shape[0]
    tile_m, n_tiles = _choose_tiling(B)
    B_pad = tile_m * n_tiles
    if B_pad != B:
        x = jnp.pad(x, ((0, B_pad - B), (0, 0)))

    # Lane-dense last layer: pad (512, 2) -> (512, 128) and (1, 2) -> (1, 128).
    w3p = jnp.pad(w3, ((0, 0), (0, OUT_PAD - ACTION_SIZE)))
    b3p = jnp.pad(b3, ((0, 0), (0, OUT_PAD - ACTION_SIZE)))

    weight_bytes = 2 * (STATE_SIZE * HIDDEN + HIDDEN * HIDDEN + HIDDEN * OUT_PAD)
    bias_bytes = 4 * (HIDDEN + HIDDEN + OUT_PAD)
    io_bytes = 4 * B_pad * STATE_SIZE + 2 * B_pad * OUT_PAD

    out = pl.pallas_call(
        dqn_kernel,
        out_shape=jax.ShapeDtypeStruct((B_pad, OUT_PAD), jnp.bfloat16),
        grid_spec=pltpu.PrefetchScalarGridSpec(
            num_scalar_prefetch=0,
            grid=(n_tiles,),
            in_specs=[
                # activations: tiled over the batch grid (double-buffered)
                pl.BlockSpec((tile_m, STATE_SIZE), lambda i: (i, 0)),
                # weights / biases: constant index_map -> DMA'd once, VMEM-resident
                pl.BlockSpec((STATE_SIZE, HIDDEN), lambda i: (0, 0)),
                pl.BlockSpec((1, HIDDEN), lambda i: (0, 0)),
                pl.BlockSpec((HIDDEN, HIDDEN), lambda i: (0, 0)),
                pl.BlockSpec((1, HIDDEN), lambda i: (0, 0)),
                pl.BlockSpec((HIDDEN, OUT_PAD), lambda i: (0, 0)),
                pl.BlockSpec((1, OUT_PAD), lambda i: (0, 0)),
            ],
            out_specs=pl.BlockSpec((tile_m, OUT_PAD), lambda i: (i, 0)),
        ),
        compiler_params=pltpu.CompilerParams(
            # batch axis is embarrassingly parallel -> shards across v7x's 2 TCs
            # (n_tiles >= 2 on the training path by construction).
            dimension_semantics=("parallel",),
        ),
        cost_estimate=pl.CostEstimate(
            flops=2 * B_pad * HIDDEN * (STATE_SIZE + HIDDEN + OUT_PAD),
            transcendentals=0,
            bytes_accessed=weight_bytes + bias_bytes + io_bytes,
        ),
    )(x, w1, b1, w2, b2, w3p, b3p)

    # Padded lanes 2..127 are zeros -- always slice before any argmax over actions.
    return out[:B, :ACTION_SIZE].astype(jnp.float32)


def init_params(key):
    """Deterministic init mirroring nn.Linear default U(-1/sqrt(fan_in), +).

    Weights stored as (in, out) bfloat16 (MXU-native, halves weight HBM traffic);
    biases stay float32 (added to the f32 accumulator).
    """
    ks = jax.random.split(key, 6)

    def linear(kw, kb, fan_in, fan_out):
        bound = 1.0 / jnp.sqrt(jnp.float32(fan_in))
        w = jax.random.uniform(kw, (fan_in, fan_out), jnp.float32, -bound, bound)
        b = jax.random.uniform(kb, (1, fan_out), jnp.float32, -bound, bound)
        return w.astype(jnp.bfloat16), b

    w1, b1 = linear(ks[0], ks[1], STATE_SIZE, HIDDEN)
    w2, b2 = linear(ks[2], ks[3], HIDDEN, HIDDEN)
    w3, b3 = linear(ks[4], ks[5], HIDDEN, ACTION_SIZE)
    return w1, b1, w2, b2, w3, b3


def reference_forward(x, w1, b1, w2, b2, w3, b3):
    """Pure-JAX reference mirroring the kernel's bf16-in / f32-accum math."""
    x = x.astype(jnp.bfloat16)
    h1 = jnp.maximum(jnp.dot(x, w1, preferred_element_type=jnp.float32) + b1, 0.0)
    h1 = h1.astype(jnp.bfloat16)
    h2 = jnp.maximum(jnp.dot(h1, w2, preferred_element_type=jnp.float32) + b2, 0.0)
    h2 = h2.astype(jnp.bfloat16)
    return jnp.dot(h2, w3, preferred_element_type=jnp.float32) + b3


if __name__ == "__main__":
    key = jax.random.PRNGKey(0)
    k_params, k_x1, k_x2 = jax.random.split(key, 3)
    params = init_params(k_params)

    fwd = jax.jit(dqn_forward)

    # Acting path: tiny batch -> single 16-row tile (no 128-row over-padding).
    B_small = 2
    x_small = jax.random.normal(k_x1, (B_small, STATE_SIZE), jnp.float32)
    out_small = jax.block_until_ready(fwd(x_small, *params))
    ref_small = reference_forward(x_small, *params)
    assert out_small.shape == (B_small, ACTION_SIZE)
    assert jnp.allclose(out_small, ref_small, atol=2e-2, rtol=2e-2), (
        float(jnp.max(jnp.abs(out_small - ref_small)))
    )

    # Training path: exercises the multi-tile grid (2 tiles -> both v7x TCs).
    B_train = 64
    x_train = jax.random.normal(k_x2, (B_train, STATE_SIZE), jnp.float32)
    out_train = jax.block_until_ready(fwd(x_train, *params))
    ref_train = reference_forward(x_train, *params)
    assert out_train.shape == (B_train, ACTION_SIZE)
    assert jnp.allclose(out_train, ref_train, atol=2e-2, rtol=2e-2), (
        float(jnp.max(jnp.abs(out_train - ref_train)))
    )

    print("KERNEL_OK")
</pallas_src>

<mosaic_0001>
module attributes {stable_mosaic.version = 11 : i64} {
  func.func @dqn_kernel(%arg0: i32, %arg1: memref<16x4xf32, #tpu.memory_space<vmem>>, %arg2: memref<4x512xbf16, #tpu.memory_space<vmem>>, %arg3: memref<1x512xf32, #tpu.memory_space<vmem>>, %arg4: memref<512x512xbf16, #tpu.memory_space<vmem>>, %arg5: memref<1x512xf32, #tpu.memory_space<vmem>>, %arg6: memref<512x128xbf16, #tpu.memory_space<vmem>>, %arg7: memref<1x128xf32, #tpu.memory_space<vmem>>, %arg8: memref<16x128xbf16, #tpu.memory_space<vmem>>) attributes {dimension_semantics = [#tpu.dimension_semantics<parallel>], iteration_bounds = array<i64: 1>, scalar_prefetch = 0 : i64, scratch_operands = 0 : i64, tpu.core_type = #tpu.core_type<tc>, window_params = [{transform_indices = @transform_0, window_bounds = array<i64: 16, 4>}, {pipeline_mode = #tpu.pipeline_mode<synchronous>, transform_indices = @transform_1, window_bounds = array<i64: 4, 512>}, {pipeline_mode = #tpu.pipeline_mode<synchronous>, transform_indices = @transform_2, window_bounds = array<i64: 1, 512>}, {pipeline_mode = #tpu.pipeline_mode<synchronous>, transform_indices = @transform_3, window_bounds = array<i64: 512, 512>}, {pipeline_mode = #tpu.pipeline_mode<synchronous>, transform_indices = @transform_4, window_bounds = array<i64: 1, 512>}, {pipeline_mode = #tpu.pipeline_mode<synchronous>, transform_indices = @transform_5, window_bounds = array<i64: 512, 128>}, {pipeline_mode = #tpu.pipeline_mode<synchronous>, transform_indices = @transform_6, window_bounds = array<i64: 1, 128>}, {transform_indices = @transform_7, window_bounds = array<i64: 16, 128>}]} {
    %c0 = arith.constant 0 : index
    %c0_0 = arith.constant 0 : index
    %0 = vector.load %arg1[%c0, %c0_0] : memref<16x4xf32, #tpu.memory_space<vmem>>, vector<16x4xf32>
    %1 = arith.truncf %0 : vector<16x4xf32> to vector<16x4xbf16>
    %c0_1 = arith.constant 0 : index
    %c0_2 = arith.constant 0 : index
    %2 = vector.load %arg2[%c0_1, %c0_2] : memref<4x512xbf16, #tpu.memory_space<vmem>>, vector<4x512xbf16>
    %cst = arith.constant dense<0.000000e+00> : vector<16x512xf32>
    %3 = tpu.matmul %1, %2, %cst {dimension_numbers = #tpu.dot_dimension_numbers<[1], [0], [0], [1], [0, 0, 1, 1], [], []>} : vector<16x4xbf16>, vector<4x512xbf16>, vector<16x512xf32> -> vector<16x512xf32>
    %c0_3 = arith.constant 0 : index
    %c0_4 = arith.constant 0 : index
    %4 = vector.load %arg3[%c0_3, %c0_4] : memref<1x512xf32, #tpu.memory_space<vmem>>, vector<1x512xf32>
    %5 = vector.broadcast %4 : vector<1x512xf32> to vector<16x512xf32>
    %6 = arith.addf %3, %5 : vector<16x512xf32>
    %cst_5 = arith.constant 0.000000e+00 : f32
    %7 = vector.broadcast %cst_5 : f32 to vector<16x512xf32>
    %8 = arith.maximumf %6, %7 : vector<16x512xf32>
    %9 = arith.truncf %8 : vector<16x512xf32> to vector<16x512xbf16>
    %c0_6 = arith.constant 0 : index
    %c0_7 = arith.constant 0 : index
    %10 = vector.load %arg4[%c0_6, %c0_7] : memref<512x512xbf16, #tpu.memory_space<vmem>>, vector<512x512xbf16>
    %cst_8 = arith.constant dense<0.000000e+00> : vector<16x512xf32>
    %11 = tpu.matmul %9, %10, %cst_8 {dimension_numbers = #tpu.dot_dimension_numbers<[1], [0], [0], [1], [0, 0, 1, 1], [], []>} : vector<16x512xbf16>, vector<512x512xbf16>, vector<16x512xf32> -> vector<16x512xf32>
    %c0_9 = arith.constant 0 : index
    %c0_10 = arith.constant 0 : index
    %12 = vector.load %arg5[%c0_9, %c0_10] : memref<1x512xf32, #tpu.memory_space<vmem>>, vector<1x512xf32>
    %13 = vector.broadcast %12 : vector<1x512xf32> to vector<16x512xf32>
    %14 = arith.addf %11, %13 : vector<16x512xf32>
    %cst_11 = arith.constant 0.000000e+00 : f32
    %15 = vector.broadcast %cst_11 : f32 to vector<16x512xf32>
    %16 = arith.maximumf %14, %15 : vector<16x512xf32>
    %17 = arith.truncf %16 : vector<16x512xf32> to vector<16x512xbf16>
    %c0_12 = arith.constant 0 : index
    %c0_13 = arith.constant 0 : index
    %18 = vector.load %arg6[%c0_12, %c0_13] : memref<512x128xbf16, #tpu.memory_space<vmem>>, vector<512x128xbf16>
    %cst_14 = arith.constant dense<0.000000e+00> : vector<16x128xf32>
    %19 = tpu.matmul %17, %18, %cst_14 {dimension_numbers = #tpu.dot_dimension_numbers<[1], [0], [0], [1], [0, 0, 1, 1], [], []>} : vector<16x512xbf16>, vector<512x128xbf16>, vector<16x128xf32> -> vector<16x128xf32>
    %c0_15 = arith.constant 0 : index
    %c0_16 = arith.constant 0 : index
    %20 = vector.load %arg7[%c0_15, %c0_16] : memref<1x128xf32, #tpu.memory_space<vmem>>, vector<1x128xf32>
    %21 = vector.broadcast %20 : vector<1x128xf32> to vector<16x128xf32>
    %22 = arith.addf %19, %21 : vector<16x128xf32>
    %23 = arith.truncf %22 : vector<16x128xf32> to vector<16x128xbf16>
    %c0_17 = arith.constant 0 : index
    %c0_18 = arith.constant 0 : index
    %24 = vector.load %arg8[%c0_17, %c0_18] : memref<16x128xbf16, #tpu.memory_space<vmem>>, vector<16x128xbf16>
    tpu.vector_store %arg8[%c0_17, %c0_18], %23 {strides = array<i32>} : memref<16x128xbf16, #tpu.memory_space<vmem>>, vector<16x128xbf16>,
    return
  }
  func.func @transform_0(%arg0: i32) -> (i32, i32) {
    %c0_i32 = arith.constant 0 : i32
    %c0_i32_0 = arith.constant 0 : i32
    return %arg0, %c0_i32 : i32, i32
  }
  func.func @transform_1(%arg0: i32) -> (i32, i32) {
    %c0_i32 = arith.constant 0 : i32
    %c0_i32_0 = arith.constant 0 : i32
    %c0_i32_1 = arith.constant 0 : i32
    return %c0_i32, %c0_i32_0 : i32, i32
  }
  func.func @transform_2(%arg0: i32) -> (i32, i32) {
    %c0_i32 = arith.constant 0 : i32
    %c0_i32_0 = arith.constant 0 : i32
    %c0_i32_1 = arith.constant 0 : i32
    return %c0_i32, %c0_i32_0 : i32, i32
  }
  func.func @transform_3(%arg0: i32) -> (i32, i32) {
    %c0_i32 = arith.constant 0 : i32
    %c0_i32_0 = arith.constant 0 : i32
    %c0_i32_1 = arith.constant 0 : i32
    return %c0_i32, %c0_i32_0 : i32, i32
  }
  func.func @transform_4(%arg0: i32) -> (i32, i32) {
    %c0_i32 = arith.constant 0 : i32
    %c0_i32_0 = arith.constant 0 : i32
    %c0_i32_1 = arith.constant 0 : i32
    return %c0_i32, %c0_i32_0 : i32, i32
  }
  func.func @transform_5(%arg0: i32) -> (i32, i32) {
    %c0_i32 = arith.constant 0 : i32
    %c0_i32_0 = arith.constant 0 : i32
    %c0_i32_1 = arith.constant 0 : i32
    return %c0_i32, %c0_i32_0 : i32, i32
  }
  func.func @transform_6(%arg0: i32) -> (i32, i32) {
    %c0_i32 = arith.constant 0 : i32
    %c0_i32_0 = arith.constant 0 : i32
    %c0_i32_1 = arith.constant 0 : i32
    return %c0_i32, %c0_i32_0 : i32, i32
  }
  func.func @transform_7(%arg0: i32) -> (i32, i32) {
    %c0_i32 = arith.constant 0 : i32
    %c0_i32_0 = arith.constant 0 : i32
    return %arg0, %c0_i32 : i32, i32
  }
}

</mosaic_0001>

<llo_original>
// kernel: dqn_forward.1
$region0: #{dqn_forward.1}
  #allocation0 [shape = 'u32[]', space=smem, size = 0x4, offset = 0x4, fixed_abs, tag = 'smem constant byte address 0x4 - core index']
  #allocation1 [shape = 'u32[144,128]{1,0:T(1,128)}', space=vmem, size = 0x12000, scoped, tag = 'internal scratch']
  %s0 = inlined_call_operand.vmem [shape: f32[16,4], index: 0, kind: input, shape index: {}]
  %s1 = inlined_call_operand.vmem [shape: bf16[4,512], index: 1, kind: input, shape index: {}]
  %s2 = inlined_call_operand.vmem [shape: f32[1,512], index: 2, kind: input, shape index: {}]
  %s3 = inlined_call_operand.hbm [shape: bf16[512,512], index: 3, kind: input, shape index: {}]
  %s4 = inlined_call_operand.vmem [shape: f32[1,512], index: 4, kind: input, shape index: {}]
  %s5 = inlined_call_operand.vmem [shape: bf16[512,128], index: 5, kind: input, shape index: {}]
  %s6 = inlined_call_operand.vmem [shape: f32[1,128], index: 6, kind: input, shape index: {}]
  %s7 = inlined_call_operand.vmem [shape: bf16[16,128], index: 7, kind: output, shape index: {}]
  %s8 = sld [smem:[#allocation0]]
  $region42: #{dqn_forward.1} parent=0
    _
  %s10 = ssub.s32 1, %s8
  %s11 = scalar_select 0, %s10, %s8
  $region1: #{dqn_forward.1} parent=0
    #allocation2 [shape = 'u8[524288]{0}', space=vmem, size = 0x80000, scoped, tag = 'input window, operand 3, single buffered']
    #allocation3 [shape = 's32[1]{0}', space=sflag, size = 0x4, scoped, tag = 'scoped memory for dqn_forward.1']
    %12 = vsyncpa [#allocation3], 0
    // Predicated region
    $region2: #{dqn_forward.1} parent=1 // pred_check
      _
    $region3: #{dqn_forward.1} parent=1 // pred_check_branch
      %14 = sbr.rel (0) target = $region5
    $region4: #{dqn_forward.1} parent=1 // pred_region
      _
    $region5: #{dqn_forward.1} parent=1 // pred_fallthru
      _
    // Predicated region
    $region6: #{dqn_forward.1} parent=1 // pred_check
      _
    $region7: #{dqn_forward.1} parent=1 // pred_check_branch
      %16 = sbr.rel (0) target = $region9
    $region8: #{dqn_forward.1} parent=1 // pred_region
      _
    $region9: #{dqn_forward.1} parent=1 // pred_fallthru
      _
    // Predicated region
    $region10: #{dqn_forward.1} parent=1 // pred_check
      _
    $region11: #{dqn_forward.1} parent=1 // pred_check_branch
      %18 = sbr.rel (0) target = $region13
    $region12: #{dqn_forward.1} parent=1 // pred_region
      _
    $region13: #{dqn_forward.1} parent=1 // pred_fallthru
      _
    // Predicated region
    $region14: #{dqn_forward.1} parent=1 // pred_check
      _
    $region15: #{dqn_forward.1} parent=1 // pred_check_branch
      %20 = sbr.rel (0) target = $region17
    $region16: #{dqn_forward.1} parent=1 // pred_region
      %s22 = ssub.s32 16384, 16384
      %23 = vsyncadd [#allocation3], %s22
      %s24 = sshll.u32 [#allocation2], 4
      %s25 = int_to_ptr.vmem [resolvable:$true] %s24
      %30 = dma.hbm_to_vmem [thread:$0]  %s3, 16384, %s25, [#allocation3], 256, 256, 16
    $region17: #{dqn_forward.1} parent=1 // pred_fallthru
      _
    // Predicated region
    $region18: #{dqn_forward.1} parent=1 // pred_check
      _
    $region19: #{dqn_forward.1} parent=1 // pred_check_branch
      %32 = sbr.rel (0) target = $region21
    $region20: #{dqn_forward.1} parent=1 // pred_region
      _
    $region21: #{dqn_forward.1} parent=1 // pred_fallthru
      _
    // Predicated region
    $region22: #{dqn_forward.1} parent=1 // pred_check
      _
    $region23: #{dqn_forward.1} parent=1 // pred_check_branch
      %34 = sbr.rel (0) target = $region25
    $region24: #{dqn_forward.1} parent=1 // pred_region
      _
    $region25: #{dqn_forward.1} parent=1 // pred_fallthru
      _
    // Predicated region
    $region26: #{dqn_forward.1} parent=1 // pred_check
      _
    $region27: #{dqn_forward.1} parent=1 // pred_check_branch
      %36 = sbr.rel (0) target = $region29
    $region28: #{dqn_forward.1} parent=1 // pred_region
      _
    $region29: #{dqn_forward.1} parent=1 // pred_fallthru
      _
    // Predicated region
    $region30: #{dqn_forward.1} parent=1 // pred_check
      _
    $region31: #{dqn_forward.1} parent=1 // pred_check_branch
      %38 = sbr.rel (0) target = $region33
    $region32: #{dqn_forward.1} parent=1 // pred_region
      %39 = dma.done [#allocation3], 16384
    $region33: #{dqn_forward.1} parent=1 // pred_fallthru
      _
    %v41 = vld [vmem:[%s0] sm:$0xff]
    %v42 = vld [vmem:[%s0 + $0x8] sm:$0xff]
    %v43 = vpack.c.bf16 %v42, %v41
    %v44 = vld [vmem:[%s1] sm:$0xff]
    %v45 = vld [vmem:[%s2] sm:$0xf]
    %v47 = vlaneseq
    %v48 = vshrl.u32 %v47, 7
    %v49 = vsub.s32 0, %v48
    %v50 = vrot.slane %v45, %v49
    %v51 = vlaneseq
    %v52 = vshrl.u32 %v51, 7
    %v53 = vsub.s32 1, %v52
    %v54 = vrot.slane %v45, %v53
    %v55 = vlaneseq
    %v56 = vshrl.u32 %v55, 7
    %v57 = vsub.s32 2, %v56
    %v58 = vrot.slane %v45, %v57
    %v59 = vlaneseq
    %v60 = vshrl.u32 %v59, 7
    %v61 = vsub.s32 3, %v60
    %v62 = vrot.slane %v45, %v61
    %v68 = vcombine.high %v44, %v44
    %v70 = vunpack.c.l.s4 1983009808
    %v71 = vunpack.c.0.s8 %v70
    %v72 = vlaneseq
    %v73 = vshrl.u32 %v72, 7
    %v74 = vsub.s32 %v71, %v73
    %v75 = vrot.slane %v44, %v74
    %v77 = vunpack.c.l.s4 1983009808
    %v78 = vunpack.c.0.s8 %v77
    %v79 = vlaneseq
    %v80 = vshrl.u32 %v79, 7
    %v81 = vsub.s32 %v78, %v80
    %v82 = vrot.slane %v68, %v81
    %v83 = vcombine.high %v75, %v75
    %v84 = vcombine.high %v82, %v82
    %vm85 = vcmask 31744
    %v87 = vsel %vm85, %v43, 0
    %vm89 = vcmask 1041408
    %v91 = vsel %vm89, %v75, 0
    %v94 = vsel %vm89, %v83, 0
    %v97 = vsel %vm89, %v82, 0
    %v100 = vsel %vm89, %v84, 0
    %102 = vmatprep.subr.bf16.mxu0 0
    %103 = vmatpush1.bf16.msra.mxu0 0
    %104 = vmatprep.subr.bf16.mxu0 0
    %105 = vmatpush1.bf16.msra.mxu0 0
    %106 = vmatprep.subr.bf16.mxu0 0
    %107 = vmatpush1.bf16.msra.mxu0 0
    %108 = vmatprep.subr.bf16.mxu0 0
    %109 = vmatpush1.bf16.msra.mxu0 0
    %110 = vmatprep.subr.bf16.mxu0 0
    %111 = vmatpush1.bf16.msra.mxu0 0
    %112 = vmatprep.subr.bf16.mxu0 0
    %113 = vmatpush1.bf16.msra.mxu0 0
    %114 = vmatprep.subr.bf16.mxu0 0
    %115 = vmatpush1.bf16.msra.mxu0 0
    %116 = vmatprep.subr.bf16.mxu0 %v94
    %117 = vmatpush1.bf16.msra.mxu0 %v91
    %118 = vmatprep.subr.bf16.mxu0 0
    %119 = vmatpush2.bf16.msra.mxu0 0
    %120 = vmatprep.subr.bf16.mxu0 0
    %121 = vmatpush2.bf16.msra.mxu0 0
    %122 = vmatprep.subr.bf16.mxu0 0
    %123 = vmatpush2.bf16.msra.mxu0 0
    %124 = vmatprep.subr.bf16.mxu0 0
    %125 = vmatpush2.bf16.msra.mxu0 0
    %126 = vmatprep.subr.bf16.mxu0 0
    %127 = vmatpush2.bf16.msra.mxu0 0
    %128 = vmatprep.subr.bf16.mxu0 0
    %129 = vmatpush2.bf16.msra.mxu0 0
    %130 = vmatprep.subr.bf16.mxu0 0
    %131 = vmatpush2.bf16.msra.mxu0 0
    %132 = vmatprep.subr.bf16.mxu0 0
    %133 = vmatpush2.bf16.msra.mxu0 0
    %134 = vmatprep.mubr.bf16.mxu0 0
    %135 = vmatmul.mubr.bf16.gmra.mxu0 %v87
    %v136 = vpop.f32.mrf.mxu0
    %v137 = vadd.f32 %v50, %v136
    %v138 = vpop.f32.mrf.mxu0
    %v139 = vadd.f32 %v54, %v138
    %v140 = vpop.f32.mrf.mxu0
    %v141 = vadd.f32 %v50, %v140
    %v142 = vpop.f32.mrf.mxu0
    %v143 = vadd.f32 %v54, %v142
    %144 = vdwg.mxu0
    %145 = vmatprep.subr.bf16.mxu0 0
    %146 = vmatpush1.bf16.msra.mxu0 0
    %147 = vmatprep.subr.bf16.mxu0 0
    %148 = vmatpush1.bf16.msra.mxu0 0
    %149 = vmatprep.subr.bf16.mxu0 0
    %150 = vmatpush1.bf16.msra.mxu0 0
    %151 = vmatprep.subr.bf16.mxu0 0
    %152 = vmatpush1.bf16.msra.mxu0 0
    %153 = vmatprep.subr.bf16.mxu0 0
    %154 = vmatpush1.bf16.msra.mxu0 0
    %155 = vmatprep.subr.bf16.mxu0 0
    %156 = vmatpush1.bf16.msra.mxu0 0
    %157 = vmatprep.subr.bf16.mxu0 0
    %158 = vmatpush1.bf16.msra.mxu0 0
    %159 = vmatprep.subr.bf16.mxu0 %v100
    %160 = vmatpush1.bf16.msra.mxu0 %v97
    %161 = vmatprep.subr.bf16.mxu0 0
    %162 = vmatpush2.bf16.msra.mxu0 0
    %163 = vmatprep.subr.bf16.mxu0 0
    %164 = vmatpush2.bf16.msra.mxu0 0
    %165 = vmatprep.subr.bf16.mxu0 0
    %166 = vmatpush2.bf16.msra.mxu0 0
    %167 = vmatprep.subr.bf16.mxu0 0
    %168 = vmatpush2.bf16.msra.mxu0 0
    %169 = vmatprep.subr.bf16.mxu0 0
    %170 = vmatpush2.bf16.msra.mxu0 0
    %171 = vmatprep.subr.bf16.mxu0 0
    %172 = vmatpush2.bf16.msra.mxu0 0
    %173 = vmatprep.subr.bf16.mxu0 0
    %174 = vmatpush2.bf16.msra.mxu0 0
    %175 = vmatprep.subr.bf16.mxu0 0
    %176 = vmatpush2.bf16.msra.mxu0 0
    %177 = vmatprep.mubr.bf16.mxu0 0
    %178 = vmatmul.mubr.bf16.gmra.mxu0 %v87
    %v179 = vpop.f32.mrf.mxu0
    %v180 = vadd.f32 %v58, %v179
    %v181 = vpop.f32.mrf.mxu0
    %v182 = vadd.f32 %v62, %v181
    %v183 = vpop.f32.mrf.mxu0
    %v184 = vadd.f32 %v58, %v183
    %v185 = vpop.f32.mrf.mxu0
    %v186 = vadd.f32 %v62, %v185
    %187 = vdwg.mxu0
    %v188 = vmax.f32 %v137, 0.0
    %v189 = vmax.f32 %v139, 0.0
    %v190 = vmax.f32 %v180, 0.0
    %v191 = vmax.f32 %v182, 0.0
    %v192 = vmax.f32 %v141, 0.0
    %v193 = vmax.f32 %v143, 0.0
    %v194 = vmax.f32 %v184, 0.0
    %v195 = vmax.f32 %v186, 0.0
    %v196 = vpack.c.bf16 %v192, %v188
    %v197 = vpack.c.bf16 %v193, %v189
    %v198 = vpack.c.bf16 %v194, %v190
    %v199 = vpack.c.bf16 %v195, %v191
    %v200 = vld [vmem:[#allocation2] sm:$0xff]
    %v201 = vld [vmem:[#allocation2 + $0x8] sm:$0xff]
    %v202 = vld [vmem:[#allocation2 + $0x10] sm:$0xff]
    %v203 = vld [vmem:[#allocation2 + $0x18] sm:$0xff]
    %v204 = vld [vmem:[#allocation2 + $0x20] sm:$0xff]
    %v205 = vld [vmem:[#allocation2 + $0x28] sm:$0xff]
    %v206 = vld [vmem:[#allocation2 + $0x30] sm:$0xff]
    %v207 = vld [vmem:[#allocation2 + $0x38] sm:$0xff]
    %v208 = vld [vmem:[#allocation2 + $0x40] sm:$0xff]
    %v209 = vld [vmem:[#allocation2 + $0x48] sm:$0xff]
    %v210 = vld [vmem:[#allocation2 + $0x50] sm:$0xff]
    %v211 = vld [vmem:[#allocation2 + $0x58] sm:$0xff]
    %v212 = vld [vmem:[#allocation2 + $0x60] sm:$0xff]
    %v213 = vld [vmem:[#allocation2 + $0x68] sm:$0xff]
    %v214 = vld [vmem:[#allocation2 + $0x70] sm:$0xff]
    %v215 = vld [vmem:[#allocation2 + $0x78] sm:$0xff]
    %v216 = vld [vmem:[#allocation2 + $0x80] sm:$0xff]
    %v217 = vld [vmem:[#allocation2 + $0x88] sm:$0xff]
    %v218 = vld [vmem:[#allocation2 + $0x90] sm:$0xff]
    %v219 = vld [vmem:[#allocation2 + $0x98] sm:$0xff]
    %v220 = vld [vmem:[#allocation2 + $0xa0] sm:$0xff]
    %v221 = vld [vmem:[#allocation2 + $0xa8] sm:$0xff]
    %v222 = vld [vmem:[#allocation2 + $0xb0] sm:$0xff]
    %v223 = vld [vmem:[#allocation2 + $0xb8] sm:$0xff]
    %v224 = vld [vmem:[#allocation2 + $0xc0] sm:$0xff]
    %v225 = vld [vmem:[#allocation2 + $0xc8] sm:$0xff]
    %v226 = vld [vmem:[#allocation2 + $0xd0] sm:$0xff]
    %v227 = vld [vmem:[#allocation2 + $0xd8] sm:$0xff]
    %v228 = vld [vmem:[#allocation2 + $0xe0] sm:$0xff]
    %v229 = vld [vmem:[#allocation2 + $0xe8] sm:$0xff]
    %v230 = vld [vmem:[#allocation2 + $0xf0] sm:$0xff]
    %v231 = vld [vmem:[#allocation2 + $0xf8] sm:$0xff]
    %v232 = vld [vmem:[#allocation2 + $0x100] sm:$0xff]
    %v233 = vld [vmem:[#allocation2 + $0x108] sm:$0xff]
    %v234 = vld [vmem:[#allocation2 + $0x110] sm:$0xff]
    %v235 = vld [vmem:[#allocation2 + $0x118] sm:$0xff]
    %v236 = vld [vmem:[#allocation2 + $0x120] sm:$0xff]
    %v237 = vld [vmem:[#allocation2 + $0x128] sm:$0xff]
    %v238 = vld [vmem:[#allocation2 + $0x130] sm:$0xff]
    %v239 = vld [vmem:[#allocation2 + $0x138] sm:$0xff]
    %v240 = vld [vmem:[#allocation2 + $0x140] sm:$0xff]
    %v241 = vld [vmem:[#allocation2 + $0x148] sm:$0xff]
    %v242 = vld [vmem:[#allocation2 + $0x150] sm:$0xff]
    %v243 = vld [vmem:[#allocation2 + $0x158] sm:$0xff]
    %v244 = vld [vmem:[#allocation2 + $0x160] sm:$0xff]
    %v245 = vld [vmem:[#allocation2 + $0x168] sm:$0xff]
    %v246 = vld [vmem:[#allocation2 + $0x170] sm:$0xff]
    %v247 = vld [vmem:[#allocation2 + $0x178] sm:$0xff]
    %v248 = vld [vmem:[#allocation2 + $0x180] sm:$0xff]
    %v249 = vld [vmem:[#allocation2 + $0x188] sm:$0xff]
    %v250 = vld [vmem:[#allocation2 + $0x190] sm:$0xff]
    %v251 = vld [vmem:[#allocation2 + $0x198] sm:$0xff]
    %v252 = vld [vmem:[#allocation2 + $0x1a0] sm:$0xff]
    %v253 = vld [vmem:[#allocation2 + $0x1a8] sm:$0xff]
    %v254 = vld [vmem:[#allocation2 + $0x1b0] sm:$0xff]
    %v255 = vld [vmem:[#allocation2 + $0x1b8] sm:$0xff]
    %v256 = vld [vmem:[#allocation2 + $0x1c0] sm:$0xff]
    %v257 = vld [vmem:[#allocation2 + $0x1c8] sm:$0xff]
    %v258 = vld [vmem:[#allocation2 + $0x1d0] sm:$0xff]
    %v259 = vld [vmem:[#allocation2 + $0x1d8] sm:$0xff]
    %v260 = vld [vmem:[#allocation2 + $0x1e0] sm:$0xff]
    %v261 = vld [vmem:[#allocation2 + $0x1e8] sm:$0xff]
    %v262 = vld [vmem:[#allocation2 + $0x1f0] sm:$0xff]
    %v263 = vld [vmem:[#allocation2 + $0x1f8] sm:$0xff]
    %v264 = vld [vmem:[#allocation2 + $0x200] sm:$0xff]
    %v265 = vld [vmem:[#allocation2 + $0x208] sm:$0xff]
    %v266 = vld [vmem:[#allocation2 + $0x210] sm:$0xff]
    %v267 = vld [vmem:[#allocation2 + $0x218] sm:$0xff]
    %v268 = vld [vmem:[#allocation2 + $0x220] sm:$0xff]
    %v269 = vld [vmem:[#allocation2 + $0x228] sm:$0xff]
    %v270 = vld [vmem:[#allocation2 + $0x230] sm:$0xff]
    %v271 = vld [vmem:[#allocation2 + $0x238] sm:$0xff]
    %v272 = vld [vmem:[#allocation2 + $0x240] sm:$0xff]
    %v273 = vld [vmem:[#allocation2 + $0x248] sm:$0xff]
    %v274 = vld [vmem:[#allocation2 + $0x250] sm:$0xff]
    %v275 = vld [vmem:[#allocation2 + $0x258] sm:$0xff]
    %v276 = vld [vmem:[#allocation2 + $0x260] sm:$0xff]
    %v277 = vld [vmem:[#allocation2 + $0x268] sm:$0xff]
    %v278 = vld [vmem:[#allocation2 + $0x270] sm:$0xff]
    %v279 = vld [vmem:[#allocation2 + $0x278] sm:$0xff]
    %v280 = vld [vmem:[#allocation2 + $0x280] sm:$0xff]
    %v281 = vld [vmem:[#allocation2 + $0x288] sm:$0xff]
    %v282 = vld [vmem:[#allocation2 + $0x290] sm:$0xff]
    %v283 = vld [vmem:[#allocation2 + $0x298] sm:$0xff]
    %v284 = vld [vmem:[#allocation2 + $0x2a0] sm:$0xff]
    %v285 = vld [vmem:[#allocation2 + $0x2a8] sm:$0xff]
    %v286 = vld [vmem:[#allocation2 + $0x2b0] sm:$0xff]
    %v287 = vld [vmem:[#allocation2 + $0x2b8] sm:$0xff]
    %v288 = vld [vmem:[#allocation2 + $0x2c0] sm:$0xff]
    %v289 = vld [vmem:[#allocation2 + $0x2c8] sm:$0xff]
    %v290 = vld [vmem:[#allocation2 + $0x2d0] sm:$0xff]
    %v291 = vld [vmem:[#allocation2 + $0x2d8] sm:$0xff]
    %v292 = vld [vmem:[#allocation2 + $0x2e0] sm:$0xff]
    %v293 = vld [vmem:[#allocation2 + $0x2e8] sm:$0xff]
    %v294 = vld [vmem:[#allocation2 + $0x2f0] sm:$0xff]
    %v295 = vld [vmem:[#allocation2 + $0x2f8] sm:$0xff]
    %v296 = vld [vmem:[#allocation2 + $0x300] sm:$0xff]
    %v297 = vld [vmem:[#allocation2 + $0x308] sm:$0xff]
    %v298 = vld [vmem:[#allocation2 + $0x310] sm:$0xff]
    %v299 = vld [vmem:[#allocation2 + $0x318] sm:$0xff]
    %v300 = vld [vmem:[#allocation2 + $0x320] sm:$0xff]
    %v301 = vld [vmem:[#allocation2 + $0x328] sm:$0xff]
    %v302 = vld [vmem:[#allocation2 + $0x330] sm:$0xff]
    %v303 = vld [vmem:[#allocation2 + $0x338] sm:$0xff]
    %v304 = vld [vmem:[#allocation2 + $0x340] sm:$0xff]
    %v305 = vld [vmem:[#allocation2 + $0x348] sm:$0xff]
    %v306 = vld [vmem:[#allocation2 + $0x350] sm:$0xff]
    %v307 = vld [vmem:[#allocation2 + $0x358] sm:$0xff]
    %v308 = vld [vmem:[#allocation2 + $0x360] sm:$0xff]
    %v309 = vld [vmem:[#allocation2 + $0x368] sm:$0xff]
    %v310 = vld [vmem:[#allocation2 + $0x370] sm:$0xff]
    %v311 = vld [vmem:[#allocation2 + $0x378] sm:$0xff]
    %v312 = vld [vmem:[#allocation2 + $0x380] sm:$0xff]
    %v313 = vld [vmem:[#allocation2 + $0x388] sm:$0xff]
    %v314 = vld [vmem:[#allocation2 + $0x390] sm:$0xff]
    %v315 = vld [vmem:[#allocation2 + $0x398] sm:$0xff]
    %v316 = vld [vmem:[#allocation2 + $0x3a0] sm:$0xff]
    %v317 = vld [vmem:[#allocation2 + $0x3a8] sm:$0xff]
    %v318 = vld [vmem:[#allocation2 + $0x3b0] sm:$0xff]
    %v319 = vld [vmem:[#allocation2 + $0x3b8] sm:$0xff]
    %v320 = vld [vmem:[#allocation2 + $0x3c0] sm:$0xff]
    %v321 = vld [vmem:[#allocation2 + $0x3c8] sm:$0xff]
    %v322 = vld [vmem:[#allocation2 + $0x3d0] sm:$0xff]
    %v323 = vld [vmem:[#allocation2 + $0x3d8] sm:$0xff]
    %v324 = vld [vmem:[#allocation2 + $0x3e0] sm:$0xff]
    %v325 = vld [vmem:[#allocation2 + $0x3e8] sm:$0xff]
    %v326 = vld [vmem:[#allocation2 + $0x3f0] sm:$0xff]
    %v327 = vld [vmem:[#allocation2 + $0x3f8] sm:$0xff]
    %v328 = vld [vmem:[%s4] sm:$0xf]
    %v330 = vlaneseq
    %v331 = vshrl.u32 %v330, 7
    %v332 = vsub.s32 0, %v331
    %v333 = vrot.slane %v328, %v332
    %v334 = vlaneseq
    %v335 = vshrl.u32 %v334, 7
    %v336 = vsub.s32 1, %v335
    %v337 = vrot.slane %v328, %v336
    %v338 = vlaneseq
    %v339 = vshrl.u32 %v338, 7
    %v340 = vsub.s32 2, %v339
    %v341 = vrot.slane %v328, %v340
    %v342 = vlaneseq
    %v343 = vshrl.u32 %v342, 7
    %v344 = vsub.s32 3, %v343
    %v345 = vrot.slane %v328, %v344
    %v478 = vunpack.c.l.b16 %v200
    %v479 = vunpack.c.h.b16 %v200
    %v480 = vunpack.c.l.b16 %v201
    %v481 = vunpack.c.h.b16 %v201
    %v482 = vunpack.c.l.b16 %v202
    %v483 = vunpack.c.h.b16 %v202
    %v484 = vunpack.c.l.b16 %v203
    %v485 = vunpack.c.h.b16 %v203
    %v486 = vunpack.c.l.b16 %v204
    %v487 = vunpack.c.h.b16 %v204
    %v488 = vunpack.c.l.b16 %v205
    %v489 = vunpack.c.h.b16 %v205
    %v490 = vunpack.c.l.b16 %v206
    %v491 = vunpack.c.h.b16 %v206
    %v492 = vunpack.c.l.b16 %v207
    %v493 = vunpack.c.h.b16 %v207
    %v494 = vunpack.c.l.b16 %v208
    %v495 = vunpack.c.h.b16 %v208
    %v496 = vunpack.c.l.b16 %v209
    %v497 = vunpack.c.h.b16 %v209
    %v498 = vunpack.c.l.b16 %v210
    %v499 = vunpack.c.h.b16 %v210
    %v500 = vunpack.c.l.b16 %v211
    %v501 = vunpack.c.h.b16 %v211
    %v502 = vunpack.c.l.b16 %v212
    %v503 = vunpack.c.h.b16 %v212
    %v504 = vunpack.c.l.b16 %v213
    %v505 = vunpack.c.h.b16 %v213
    %v506 = vunpack.c.l.b16 %v214
    %v507 = vunpack.c.h.b16 %v214
    %v508 = vunpack.c.l.b16 %v215
    %v509 = vunpack.c.h.b16 %v215
    %v510 = vunpack.c.l.b16 %v216
    %v511 = vunpack.c.h.b16 %v216
    %v512 = vunpack.c.l.b16 %v217
    %v513 = vunpack.c.h.b16 %v217
    %v514 = vunpack.c.l.b16 %v218
    %v515 = vunpack.c.h.b16 %v218
    %v516 = vunpack.c.l.b16 %v219
    %v517 = vunpack.c.h.b16 %v219
    %v518 = vunpack.c.l.b16 %v220
    %v519 = vunpack.c.h.b16 %v220
    %v520 = vunpack.c.l.b16 %v221
    %v521 = vunpack.c.h.b16 %v221
    %v522 = vunpack.c.l.b16 %v222
    %v523 = vunpack.c.h.b16 %v222
    %v524 = vunpack.c.l.b16 %v223
    %v525 = vunpack.c.h.b16 %v223
    %v526 = vunpack.c.l.b16 %v224
    %v527 = vunpack.c.h.b16 %v224
    %v528 = vunpack.c.l.b16 %v225
    %v529 = vunpack.c.h.b16 %v225
    %v530 = vunpack.c.l.b16 %v226
    %v531 = vunpack.c.h.b16 %v226
    %v532 = vunpack.c.l.b16 %v227
    %v533 = vunpack.c.h.b16 %v227
    %v534 = vunpack.c.l.b16 %v228
    %v535 = vunpack.c.h.b16 %v228
    %v536 = vunpack.c.l.b16 %v229
    %v537 = vunpack.c.h.b16 %v229
    %v538 = vunpack.c.l.b16 %v230
    %v539 = vunpack.c.h.b16 %v230
    %v540 = vunpack.c.l.b16 %v231
    %v541 = vunpack.c.h.b16 %v231
    %v542 = vunpack.c.l.b16 %v232
    %v543 = vunpack.c.h.b16 %v232
    %v544 = vunpack.c.l.b16 %v233
    %v545 = vunpack.c.h.b16 %v233
    %v546 = vunpack.c.l.b16 %v234
    %v547 = vunpack.c.h.b16 %v234
    %v548 = vunpack.c.l.b16 %v235
    %v549 = vunpack.c.h.b16 %v235
    %v550 = vunpack.c.l.b16 %v236
    %v551 = vunpack.c.h.b16 %v236
    %v552 = vunpack.c.l.b16 %v237
    %v553 = vunpack.c.h.b16 %v237
    %v554 = vunpack.c.l.b16 %v238
    %v555 = vunpack.c.h.b16 %v238
    %v556 = vunpack.c.l.b16 %v239
    %v557 = vunpack.c.h.b16 %v239
    %v558 = vunpack.c.l.b16 %v240
    %v559 = vunpack.c.h.b16 %v240
    %v560 = vunpack.c.l.b16 %v241
    %v561 = vunpack.c.h.b16 %v241
    %v562 = vunpack.c.l.b16 %v242
    %v563 = vunpack.c.h.b16 %v242
    %v564 = vunpack.c.l.b16 %v243
    %v565 = vunpack.c.h.b16 %v243
    %v566 = vunpack.c.l.b16 %v244
    %v567 = vunpack.c.h.b16 %v244
    %v568 = vunpack.c.l.b16 %v245
    %v569 = vunpack.c.h.b16 %v245
    %v570 = vunpack.c.l.b16 %v246
    %v571 = vunpack.c.h.b16 %v246
    %v572 = vunpack.c.l.b16 %v247
    %v573 = vunpack.c.h.b16 %v247
    %v574 = vunpack.c.l.b16 %v248
    %v575 = vunpack.c.h.b16 %v248
    %v576 = vunpack.c.l.b16 %v249
    %v577 = vunpack.c.h.b16 %v249
    %v578 = vunpack.c.l.b16 %v250
    %v579 = vunpack.c.h.b16 %v250
    %v580 = vunpack.c.l.b16 %v251
    %v581 = vunpack.c.h.b16 %v251
    %v582 = vunpack.c.l.b16 %v252
    %v583 = vunpack.c.h.b16 %v252
    %v584 = vunpack.c.l.b16 %v253
    %v585 = vunpack.c.h.b16 %v253
    %v586 = vunpack.c.l.b16 %v254
    %v587 = vunpack.c.h.b16 %v254
    %v588 = vunpack.c.l.b16 %v255
    %v589 = vunpack.c.h.b16 %v255
    %v590 = vunpack.c.l.b16 %v256
    %v591 = vunpack.c.h.b16 %v256
    %v592 = vunpack.c.l.b16 %v257
    %v593 = vunpack.c.h.b16 %v257
    %v594 = vunpack.c.l.b16 %v258
    %v595 = vunpack.c.h.b16 %v258
    %v596 = vunpack.c.l.b16 %v259
    %v597 = vunpack.c.h.b16 %v259
    %v598 = vunpack.c.l.b16 %v260
    %v599 = vunpack.c.h.b16 %v260
    %v600 = vunpack.c.l.b16 %v261
    %v601 = vunpack.c.h.b16 %v261
    %v602 = vunpack.c.l.b16 %v262
    %v603 = vunpack.c.h.b16 %v262
    %v604 = vunpack.c.l.b16 %v263
    %v605 = vunpack.c.h.b16 %v263
    %v606 = vunpack.c.l.b16 %v264
    %v607 = vunpack.c.h.b16 %v264
    %v608 = vunpack.c.l.b16 %v265
    %v609 = vunpack.c.h.b16 %v265
    %v610 = vunpack.c.l.b16 %v266
    %v611 = vunpack.c.h.b16 %v266
    %v612 = vunpack.c.l.b16 %v267
    %v613 = vunpack.c.h.b16 %v267
    %v614 = vunpack.c.l.b16 %v268
    %v615 = vunpack.c.h.b16 %v268
    %v616 = vunpack.c.l.b16 %v269
    %v617 = vunpack.c.h.b16 %v269
    %v618 = vunpack.c.l.b16 %v270
    %v619 = vunpack.c.h.b16 %v270
    %v620 = vunpack.c.l.b16 %v271
    %v621 = vunpack.c.h.b16 %v271
    %v622 = vunpack.c.l.b16 %v272
    %v623 = vunpack.c.h.b16 %v272
    %v624 = vunpack.c.l.b16 %v273
    %v625 = vunpack.c.h.b16 %v273
    %v626 = vunpack.c.l.b16 %v274
    %v627 = vunpack.c.h.b16 %v274
    %v628 = vunpack.c.l.b16 %v275
    %v629 = vunpack.c.h.b16 %v275
    %v630 = vunpack.c.l.b16 %v276
    %v631 = vunpack.c.h.b16 %v276
    %v632 = vunpack.c.l.b16 %v277
    %v633 = vunpack.c.h.b16 %v277
    %v634 = vunpack.c.l.b16 %v278
    %v635 = vunpack.c.h.b16 %v278
    %v636 = vunpack.c.l.b16 %v279
    %v637 = vunpack.c.h.b16 %v279
    %v638 = vunpack.c.l.b16 %v280
    %v639 = vunpack.c.h.b16 %v280
    %v640 = vunpack.c.l.b16 %v281
    %v641 = vunpack.c.h.b16 %v281
    %v642 = vunpack.c.l.b16 %v282
    %v643 = vunpack.c.h.b16 %v282
    %v644 = vunpack.c.l.b16 %v283
    %v645 = vunpack.c.h.b16 %v283
    %v646 = vunpack.c.l.b16 %v284
    %v647 = vunpack.c.h.b16 %v284
    %v648 = vunpack.c.l.b16 %v285
    %v649 = vunpack.c.h.b16 %v285
    %v650 = vunpack.c.l.b16 %v286
    %v651 = vunpack.c.h.b16 %v286
    %v652 = vunpack.c.l.b16 %v287
    %v653 = vunpack.c.h.b16 %v287
    %v654 = vunpack.c.l.b16 %v288
    %v655 = vunpack.c.h.b16 %v288
    %v656 = vunpack.c.l.b16 %v289
    %v657 = vunpack.c.h.b16 %v289
    %v658 = vunpack.c.l.b16 %v290
    %v659 = vunpack.c.h.b16 %v290
    %v660 = vunpack.c.l.b16 %v291
    %v661 = vunpack.c.h.b16 %v291
    %v662 = vunpack.c.l.b16 %v292
    %v663 = vunpack.c.h.b16 %v292
    %v664 = vunpack.c.l.b16 %v293
    %v665 = vunpack.c.h.b16 %v293
    %v666 = vunpack.c.l.b16 %v294
    %v667 = vunpack.c.h.b16 %v294
    %v668 = vunpack.c.l.b16 %v295
    %v669 = vunpack.c.h.b16 %v295
    %v670 = vunpack.c.l.b16 %v296
    %v671 = vunpack.c.h.b16 %v296
    %v672 = vunpack.c.l.b16 %v297
    %v673 = vunpack.c.h.b16 %v297
    %v674 = vunpack.c.l.b16 %v298
    %v675 = vunpack.c.h.b16 %v298
    %v676 = vunpack.c.l.b16 %v299
    %v677 = vunpack.c.h.b16 %v299
    %v678 = vunpack.c.l.b16 %v300
    %v679 = vunpack.c.h.b16 %v300
    %v680 = vunpack.c.l.b16 %v301
    %v681 = vunpack.c.h.b16 %v301
    %v682 = vunpack.c.l.b16 %v302
    %v683 = vunpack.c.h.b16 %v302
    %v684 = vunpack.c.l.b16 %v303
    %v685 = vunpack.c.h.b16 %v303
    %v686 = vunpack.c.l.b16 %v304
    %v687 = vunpack.c.h.b16 %v304
    %v688 = vunpack.c.l.b16 %v305
    %v689 = vunpack.c.h.b16 %v305
    %v690 = vunpack.c.l.b16 %v306
    %v691 = vunpack.c.h.b16 %v306
    %v692 = vunpack.c.l.b16 %v307
    %v693 = vunpack.c.h.b16 %v307
    %v694 = vunpack.c.l.b16 %v308
    %v695 = vunpack.c.h.b16 %v308
    %v696 = vunpack.c.l.b16 %v309
    %v697 = vunpack.c.h.b16 %v309
    %v698 = vunpack.c.l.b16 %v310
    %v699 = vunpack.c.h.b16 %v310
    %v700 = vunpack.c.l.b16 %v311
    %v701 = vunpack.c.h.b16 %v311
    %v702 = vunpack.c.l.b16 %v312
    %v703 = vunpack.c.h.b16 %v312
    %v704 = vunpack.c.l.b16 %v313
    %v705 = vunpack.c.h.b16 %v313
    %v706 = vunpack.c.l.b16 %v314
    %v707 = vunpack.c.h.b16 %v314
    %v708 = vunpack.c.l.b16 %v315
    %v709 = vunpack.c.h.b16 %v315
    %v710 = vunpack.c.l.b16 %v316
    %v711 = vunpack.c.h.b16 %v316
    %v712 = vunpack.c.l.b16 %v317
    %v713 = vunpack.c.h.b16 %v317
    %v714 = vunpack.c.l.b16 %v318
    %v715 = vunpack.c.h.b16 %v318
    %v716 = vunpack.c.l.b16 %v319
    %v717 = vunpack.c.h.b16 %v319
    %v718 = vunpack.c.l.b16 %v320
    %v719 = vunpack.c.h.b16 %v320
    %v720 = vunpack.c.l.b16 %v321
    %v721 = vunpack.c.h.b16 %v321
    %v722 = vunpack.c.l.b16 %v322
    %v723 = vunpack.c.h.b16 %v322
    %v724 = vunpack.c.l.b16 %v323
    %v725 = vunpack.c.h.b16 %v323
    %v726 = vunpack.c.l.b16 %v324
    %v727 = vunpack.c.h.b16 %v324
    %v728 = vunpack.c.l.b16 %v325
    %v729 = vunpack.c.h.b16 %v325
    %v730 = vunpack.c.l.b16 %v326
    %v731 = vunpack.c.h.b16 %v326
    %v732 = vunpack.c.l.b16 %v327
    %v733 = vunpack.c.h.b16 %v327
    %v734 = vpack.c.b16 %v482, %v478
    %v735 = vpack.c.b16 %v483, %v479
    %v736 = vpack.c.b16 %v484, %v480
    %v737 = vpack.c.b16 %v485, %v481
    %v738 = vpack.c.b16 %v490, %v486
    %v739 = vpack.c.b16 %v491, %v487
    %v740 = vpack.c.b16 %v492, %v488
    %v741 = vpack.c.b16 %v493, %v489
    %v742 = vpack.c.b16 %v498, %v494
    %v743 = vpack.c.b16 %v499, %v495
    %v744 = vpack.c.b16 %v500, %v496
    %v745 = vpack.c.b16 %v501, %v497
    %v746 = vpack.c.b16 %v506, %v502
    %v747 = vpack.c.b16 %v507, %v503
    %v748 = vpack.c.b16 %v508, %v504
    %v749 = vpack.c.b16 %v509, %v505
    %v750 = vpack.c.b16 %v514, %v510
    %v751 = vpack.c.b16 %v515, %v511
    %v752 = vpack.c.b16 %v516, %v512
    %v753 = vpack.c.b16 %v517, %v513
    %v754 = vpack.c.b16 %v522, %v518
    %v755 = vpack.c.b16 %v523, %v519
    %v756 = vpack.c.b16 %v524, %v520
    %v757 = vpack.c.b16 %v525, %v521
    %v758 = vpack.c.b16 %v530, %v526
    %v759 = vpack.c.b16 %v531, %v527
    %v760 = vpack.c.b16 %v532, %v528
    %v761 = vpack.c.b16 %v533, %v529
    %v762 = vpack.c.b16 %v538, %v534
    %v763 = vpack.c.b16 %v539, %v535
    %v764 = vpack.c.b16 %v540, %v536
    %v765 = vpack.c.b16 %v541, %v537
    %v766 = vpack.c.b16 %v546, %v542
    %v767 = vpack.c.b16 %v547, %v543
    %v768 = vpack.c.b16 %v548, %v544
    %v769 = vpack.c.b16 %v549, %v545
    %v770 = vpack.c.b16 %v554, %v550
    %v771 = vpack.c.b16 %v555, %v551
    %v772 = vpack.c.b16 %v556, %v552
    %v773 = vpack.c.b16 %v557, %v553
    %v774 = vpack.c.b16 %v562, %v558
    %v775 = vpack.c.b16 %v563, %v559
    %v776 = vpack.c.b16 %v564, %v560
    %v777 = vpack.c.b16 %v565, %v561
    %v778 = vpack.c.b16 %v570, %v566
    %v779 = vpack.c.b16 %v571, %v567
    %v780 = vpack.c.b16 %v572, %v568
    %v781 = vpack.c.b16 %v573, %v569
    %v782 = vpack.c.b16 %v578, %v574
    %v783 = vpack.c.b16 %v579, %v575
    %v784 = vpack.c.b16 %v580, %v576
    %v785 = vpack.c.b16 %v581, %v577
    %v786 = vpack.c.b16 %v586, %v582
    %v787 = vpack.c.b16 %v587, %v583
    %v788 = vpack.c.b16 %v588, %v584
    %v789 = vpack.c.b16 %v589, %v585
    %v790 = vpack.c.b16 %v594, %v590
    %v791 = vpack.c.b16 %v595, %v591
    %v792 = vpack.c.b16 %v596, %v592
    %v793 = vpack.c.b16 %v597, %v593
    %v794 = vpack.c.b16 %v602, %v598
    %v795 = vpack.c.b16 %v603, %v599
    %v796 = vpack.c.b16 %v604, %v600
    %v797 = vpack.c.b16 %v605, %v601
    %v798 = vpack.c.b16 %v610, %v606
    %v799 = vpack.c.b16 %v611, %v607
    %v800 = vpack.c.b16 %v612, %v608
    %v801 = vpack.c.b16 %v613, %v609
    %v802 = vpack.c.b16 %v618, %v614
    %v803 = vpack.c.b16 %v619, %v615
    %v804 = vpack.c.b16 %v620, %v616
    %v805 = vpack.c.b16 %v621, %v617
    %v806 = vpack.c.b16 %v626, %v622
    %v807 = vpack.c.b16 %v627, %v623
    %v808 = vpack.c.b16 %v628, %v624
    %v809 = vpack.c.b16 %v629, %v625
    %v810 = vpack.c.b16 %v634, %v630
    %v811 = vpack.c.b16 %v635, %v631
    %v812 = vpack.c.b16 %v636, %v632
    %v813 = vpack.c.b16 %v637, %v633
    %v814 = vpack.c.b16 %v642, %v638
    %v815 = vpack.c.b16 %v643, %v639
    %v816 = vpack.c.b16 %v644, %v640
    %v817 = vpack.c.b16 %v645, %v641
    %v818 = vpack.c.b16 %v650, %v646
    %v819 = vpack.c.b16 %v651, %v647
    %v820 = vpack.c.b16 %v652, %v648
    %v821 = vpack.c.b16 %v653, %v649
    %v822 = vpack.c.b16 %v658, %v654
    %v823 = vpack.c.b16 %v659, %v655
    %v824 = vpack.c.b16 %v660, %v656
    %v825 = vpack.c.b16 %v661, %v657
    %v826 = vpack.c.b16 %v666, %v662
    %v827 = vpack.c.b16 %v667, %v663
    %v828 = vpack.c.b16 %v668, %v664
    %v829 = vpack.c.b16 %v669, %v665
    %v830 = vpack.c.b16 %v674, %v670
    %v831 = vpack.c.b16 %v675, %v671
    %v832 = vpack.c.b16 %v676, %v672
    %v833 = vpack.c.b16 %v677, %v673
    %v834 = vpack.c.b16 %v682, %v678
    %v835 = vpack.c.b16 %v683, %v679
    %v836 = vpack.c.b16 %v684, %v680
    %v837 = vpack.c.b16 %v685, %v681
    %v838 = vpack.c.b16 %v690, %v686
    %v839 = vpack.c.b16 %v691, %v687
    %v840 = vpack.c.b16 %v692, %v688
    %v841 = vpack.c.b16 %v693, %v689
    %v842 = vpack.c.b16 %v698, %v694
    %v843 = vpack.c.b16 %v699, %v695
    %v844 = vpack.c.b16 %v700, %v696
    %v845 = vpack.c.b16 %v701, %v697
    %v846 = vpack.c.b16 %v706, %v702
    %v847 = vpack.c.b16 %v707, %v703
    %v848 = vpack.c.b16 %v708, %v704
    %v849 = vpack.c.b16 %v709, %v705
    %v850 = vpack.c.b16 %v714, %v710
    %v851 = vpack.c.b16 %v715, %v711
    %v852 = vpack.c.b16 %v716, %v712
    %v853 = vpack.c.b16 %v717, %v713
    %v854 = vpack.c.b16 %v722, %v718
    %v855 = vpack.c.b16 %v723, %v719
    %v856 = vpack.c.b16 %v724, %v720
    %v857 = vpack.c.b16 %v725, %v721
    %v858 = vpack.c.b16 %v730, %v726
    %v859 = vpack.c.b16 %v731, %v727
    %v860 = vpack.c.b16 %v732, %v728
    %v861 = vpack.c.b16 %v733, %v729
    %990 = vmatprep.subr.bf16.mxu0 %v763
    %991 = vmatpush1.bf16.msra.mxu0 %v762
    %992 = vmatprep.subr.bf16.mxu0 %v759
    %993 = vmatpush1.bf16.msra.mxu0 %v758
    %994 = vmatprep.subr.bf16.mxu0 %v755
    %995 = vmatpush1.bf16.msra.mxu0 %v754
    %996 = vmatprep.subr.bf16.mxu0 %v751
    %997 = vmatpush1.bf16.msra.mxu0 %v750
    %998 = vmatprep.subr.bf16.mxu0 %v747
    %999 = vmatpush1.bf16.msra.mxu0 %v746
    %1000 = vmatprep.subr.bf16.mxu0 %v743
    %1001 = vmatpush1.bf16.msra.mxu0 %v742
    %1002 = vmatprep.subr.bf16.mxu0 %v739
    %1003 = vmatpush1.bf16.msra.mxu0 %v738
    %1004 = vmatprep.subr.bf16.mxu0 %v735
    %1005 = vmatpush1.bf16.msra.mxu0 %v734
    %1006 = vmatprep.subr.bf16.mxu0 %v795
    %1007 = vmatpush2.bf16.msra.mxu0 %v794
    %1008 = vmatprep.subr.bf16.mxu0 %v791
    %1009 = vmatpush2.bf16.msra.mxu0 %v790
    %1010 = vmatprep.subr.bf16.mxu0 %v787
    %1011 = vmatpush2.bf16.msra.mxu0 %v786
    %1012 = vmatprep.subr.bf16.mxu0 %v783
    %1013 = vmatpush2.bf16.msra.mxu0 %v782
    %1014 = vmatprep.subr.bf16.mxu0 %v779
    %1015 = vmatpush2.bf16.msra.mxu0 %v778
    %1016 = vmatprep.subr.bf16.mxu0 %v775
    %1017 = vmatpush2.bf16.msra.mxu0 %v774
    %1018 = vmatprep.subr.bf16.mxu0 %v771
    %1019 = vmatpush2.bf16.msra.mxu0 %v770
    %1020 = vmatprep.subr.bf16.mxu0 %v767
    %1021 = vmatpush2.bf16.msra.mxu0 %v766
    %1022 = vmatprep.mubr.bf16.mxu0 %v197
    %1023 = vmatmul.mubr.bf16.gmra.mxu0 %v196
    %v1024 = vpop.f32.mrf.mxu0
    %v1025 = vadd.f32 %v333, %v1024
    %v1026 = vpop.f32.mrf.mxu0
    %v1027 = vadd.f32 %v337, %v1026
    %v1028 = vpop.f32.mrf.mxu0
    %v1029 = vadd.f32 %v333, %v1028
    %v1030 = vpop.f32.mrf.mxu0
    %v1031 = vadd.f32 %v337, %v1030
    %1032 = vdwg.mxu0
    %1033 = vmatprep.subr.bf16.mxu0 %v827
    %1034 = vmatpush1.bf16.msra.mxu0 %v826
    %1035 = vmatprep.subr.bf16.mxu0 %v823
    %1036 = vmatpush1.bf16.msra.mxu0 %v822
    %1037 = vmatprep.subr.bf16.mxu0 %v819
    %1038 = vmatpush1.bf16.msra.mxu0 %v818
    %1039 = vmatprep.subr.bf16.mxu0 %v815
    %1040 = vmatpush1.bf16.msra.mxu0 %v814
    %1041 = vmatprep.subr.bf16.mxu0 %v811
    %1042 = vmatpush1.bf16.msra.mxu0 %v810
    %1043 = vmatprep.subr.bf16.mxu0 %v807
    %1044 = vmatpush1.bf16.msra.mxu0 %v806
    %1045 = vmatprep.subr.bf16.mxu0 %v803
    %1046 = vmatpush1.bf16.msra.mxu0 %v802
    %1047 = vmatprep.subr.bf16.mxu0 %v799
    %1048 = vmatpush1.bf16.msra.mxu0 %v798
    %1049 = vmatprep.subr.bf16.mxu0 %v859
    %1050 = vmatpush2.bf16.msra.mxu0 %v858
    %1051 = vmatprep.subr.bf16.mxu0 %v855
    %1052 = vmatpush2.bf16.msra.mxu0 %v854
    %1053 = vmatprep.subr.bf16.mxu0 %v851
    %1054 = vmatpush2.bf16.msra.mxu0 %v850
    %1055 = vmatprep.subr.bf16.mxu0 %v847
    %1056 = vmatpush2.bf16.msra.mxu0 %v846
    %1057 = vmatprep.subr.bf16.mxu0 %v843
    %1058 = vmatpush2.bf16.msra.mxu0 %v842
    %1059 = vmatprep.subr.bf16.mxu0 %v839
    %1060 = vmatpush2.bf16.msra.mxu0 %v838
    %1061 = vmatprep.subr.bf16.mxu0 %v835
    %1062 = vmatpush2.bf16.msra.mxu0 %v834
    %1063 = vmatprep.subr.bf16.mxu0 %v831
    %1064 = vmatpush2.bf16.msra.mxu0 %v830
    %1065 = vmatprep.mubr.bf16.mxu0 %v199
    %1066 = vmatmul.mubr.bf16.gmra.mxu0 %v198
    %v1067 = vpop.f32.mrf.mxu0
    %v1068 = vadd.f32 %v1025, %v1067
    %v1069 = vpop.f32.mrf.mxu0
    %v1070 = vadd.f32 %v1027, %v1069
    %v1071 = vpop.f32.mrf.mxu0
    %v1072 = vadd.f32 %v1029, %v1071
    %v1073 = vpop.f32.mrf.mxu0
    %v1074 = vadd.f32 %v1031, %v1073
    %1075 = vdwg.mxu0
    %1076 = vmatprep.subr.bf16.mxu0 %v765
    %1077 = vmatpush1.bf16.msra.mxu0 %v764
    %1078 = vmatprep.subr.bf16.mxu0 %v761
    %1079 = vmatpush1.bf16.msra.mxu0 %v760
    %1080 = vmatprep.subr.bf16.mxu0 %v757
    %1081 = vmatpush1.bf16.msra.mxu0 %v756
    %1082 = vmatprep.subr.bf16.mxu0 %v753
    %1083 = vmatpush1.bf16.msra.mxu0 %v752
    %1084 = vmatprep.subr.bf16.mxu0 %v749
    %1085 = vmatpush1.bf16.msra.mxu0 %v748
    %1086 = vmatprep.subr.bf16.mxu0 %v745
    %1087 = vmatpush1.bf16.msra.mxu0 %v744
    %1088 = vmatprep.subr.bf16.mxu0 %v741
    %1089 = vmatpush1.bf16.msra.mxu0 %v740
    %1090 = vmatprep.subr.bf16.mxu0 %v737
    %1091 = vmatpush1.bf16.msra.mxu0 %v736
    %1092 = vmatprep.subr.bf16.mxu0 %v797
    %1093 = vmatpush2.bf16.msra.mxu0 %v796
    %1094 = vmatprep.subr.bf16.mxu0 %v793
    %1095 = vmatpush2.bf16.msra.mxu0 %v792
    %1096 = vmatprep.subr.bf16.mxu0 %v789
    %1097 = vmatpush2.bf16.msra.mxu0 %v788
    %1098 = vmatprep.subr.bf16.mxu0 %v785
    %1099 = vmatpush2.bf16.msra.mxu0 %v784
    %1100 = vmatprep.subr.bf16.mxu0 %v781
    %1101 = vmatpush2.bf16.msra.mxu0 %v780
    %1102 = vmatprep.subr.bf16.mxu0 %v777
    %1103 = vmatpush2.bf16.msra.mxu0 %v776
    %1104 = vmatprep.subr.bf16.mxu0 %v773
    %1105 = vmatpush2.bf16.msra.mxu0 %v772
    %1106 = vmatprep.subr.bf16.mxu0 %v769
    %1107 = vmatpush2.bf16.msra.mxu0 %v768
    %1108 = vmatprep.mubr.bf16.mxu0 %v197
    %1109 = vmatmul.mubr.bf16.gmra.mxu0 %v196
    %v1110 = vpop.f32.mrf.mxu0
    %v1111 = vadd.f32 %v341, %v1110
    %v1112 = vpop.f32.mrf.mxu0
    %v1113 = vadd.f32 %v345, %v1112
    %v1114 = vpop.f32.mrf.mxu0
    %v1115 = vadd.f32 %v341, %v1114
    %v1116 = vpop.f32.mrf.mxu0
    %v1117 = vadd.f32 %v345, %v1116
    %1118 = vdwg.mxu0
    %1119 = vmatprep.subr.bf16.mxu0 %v829
    %1120 = vmatpush1.bf16.msra.mxu0 %v828
    %1121 = vmatprep.subr.bf16.mxu0 %v825
    %1122 = vmatpush1.bf16.msra.mxu0 %v824
    %1123 = vmatprep.subr.bf16.mxu0 %v821
    %1124 = vmatpush1.bf16.msra.mxu0 %v820
    %1125 = vmatprep.subr.bf16.mxu0 %v817
    %1126 = vmatpush1.bf16.msra.mxu0 %v816
    %1127 = vmatprep.subr.bf16.mxu0 %v813
    %1128 = vmatpush1.bf16.msra.mxu0 %v812
    %1129 = vmatprep.subr.bf16.mxu0 %v809
    %1130 = vmatpush1.bf16.msra.mxu0 %v808
    %1131 = vmatprep.subr.bf16.mxu0 %v805
    %1132 = vmatpush1.bf16.msra.mxu0 %v804
    %1133 = vmatprep.subr.bf16.mxu0 %v801
    %1134 = vmatpush1.bf16.msra.mxu0 %v800
    %1135 = vmatprep.subr.bf16.mxu0 %v861
    %1136 = vmatpush2.bf16.msra.mxu0 %v860
    %1137 = vmatprep.subr.bf16.mxu0 %v857
    %1138 = vmatpush2.bf16.msra.mxu0 %v856
    %1139 = vmatprep.subr.bf16.mxu0 %v853
    %1140 = vmatpush2.bf16.msra.mxu0 %v852
    %1141 = vmatprep.subr.bf16.mxu0 %v849
    %1142 = vmatpush2.bf16.msra.mxu0 %v848
    %1143 = vmatprep.subr.bf16.mxu0 %v845
    %1144 = vmatpush2.bf16.msra.mxu0 %v844
    %1145 = vmatprep.subr.bf16.mxu0 %v841
    %1146 = vmatpush2.bf16.msra.mxu0 %v840
    %1147 = vmatprep.subr.bf16.mxu0 %v837
    %1148 = vmatpush2.bf16.msra.mxu0 %v836
    %1149 = vmatprep.subr.bf16.mxu0 %v833
    %1150 = vmatpush2.bf16.msra.mxu0 %v832
    %1151 = vmatprep.mubr.bf16.mxu0 %v199
    %1152 = vmatmul.mubr.bf16.gmra.mxu0 %v198
    %v1153 = vpop.f32.mrf.mxu0
    %v1154 = vadd.f32 %v1111, %v1153
    %v1155 = vpop.f32.mrf.mxu0
    %v1156 = vadd.f32 %v1113, %v1155
    %v1157 = vpop.f32.mrf.mxu0
    %v1158 = vadd.f32 %v1115, %v1157
    %v1159 = vpop.f32.mrf.mxu0
    %v1160 = vadd.f32 %v1117, %v1159
    %1161 = vdwg.mxu0
    %v1162 = vmax.f32 %v1068, 0.0
    %v1163 = vmax.f32 %v1070, 0.0
    %v1164 = vmax.f32 %v1154, 0.0
    %v1165 = vmax.f32 %v1156, 0.0
    %v1166 = vmax.f32 %v1072, 0.0
    %v1167 = vmax.f32 %v1074, 0.0
    %v1168 = vmax.f32 %v1158, 0.0
    %v1169 = vmax.f32 %v1160, 0.0
    %v1170 = vpack.c.bf16 %v1166, %v1162
    %v1171 = vpack.c.bf16 %v1167, %v1163
    %v1172 = vpack.c.bf16 %v1168, %v1164
    %v1173 = vpack.c.bf16 %v1169, %v1165
    %v1174 = vld [vmem:[%s5] sm:$0xf]
    %v1175 = vld [vmem:[%s5 + $0x4] sm:$0xf]
    %v1176 = vld [vmem:[%s5 + $0x8] sm:$0xf]
    %v1177 = vld [vmem:[%s5 + $0xc] sm:$0xf]
    %v1178 = vld [vmem:[%s5 + $0x10] sm:$0xf]
    %v1179 = vld [vmem:[%s5 + $0x14] sm:$0xf]
    %v1180 = vld [vmem:[%s5 + $0x18] sm:$0xf]
    %v1181 = vld [vmem:[%s5 + $0x1c] sm:$0xf]
    %v1182 = vld [vmem:[%s5 + $0x20] sm:$0xf]
    %v1183 = vld [vmem:[%s5 + $0x24] sm:$0xf]
    %v1184 = vld [vmem:[%s5 + $0x28] sm:$0xf]
    %v1185 = vld [vmem:[%s5 + $0x2c] sm:$0xf]
    %v1186 = vld [vmem:[%s5 + $0x30] sm:$0xf]
    %v1187 = vld [vmem:[%s5 + $0x34] sm:$0xf]
    %v1188 = vld [vmem:[%s5 + $0x38] sm:$0xf]
    %v1189 = vld [vmem:[%s5 + $0x3c] sm:$0xf]
    %v1190 = vld [vmem:[%s5 + $0x40] sm:$0xf]
    %v1191 = vld [vmem:[%s5 + $0x44] sm:$0xf]
    %v1192 = vld [vmem:[%s5 + $0x48] sm:$0xf]
    %v1193 = vld [vmem:[%s5 + $0x4c] sm:$0xf]
    %v1194 = vld [vmem:[%s5 + $0x50] sm:$0xf]
    %v1195 = vld [vmem:[%s5 + $0x54] sm:$0xf]
    %v1196 = vld [vmem:[%s5 + $0x58] sm:$0xf]
    %v1197 = vld [vmem:[%s5 + $0x5c] sm:$0xf]
    %v1198 = vld [vmem:[%s5 + $0x60] sm:$0xf]
    %v1199 = vld [vmem:[%s5 + $0x64] sm:$0xf]
    %v1200 = vld [vmem:[%s5 + $0x68] sm:$0xf]
    %v1201 = vld [vmem:[%s5 + $0x6c] sm:$0xf]
    %v1202 = vld [vmem:[%s5 + $0x70] sm:$0xf]
    %v1203 = vld [vmem:[%s5 + $0x74] sm:$0xf]
    %v1204 = vld [vmem:[%s5 + $0x78] sm:$0xf]
    %v1205 = vld [vmem:[%s5 + $0x7c] sm:$0xf]
    %v1206 = vld [vmem:[%s5 + $0x80] sm:$0xf]
    %v1207 = vld [vmem:[%s5 + $0x84] sm:$0xf]
    %v1208 = vld [vmem:[%s5 + $0x88] sm:$0xf]
    %v1209 = vld [vmem:[%s5 + $0x8c] sm:$0xf]
    %v1210 = vld [vmem:[%s5 + $0x90] sm:$0xf]
    %v1211 = vld [vmem:[%s5 + $0x94] sm:$0xf]
    %v1212 = vld [vmem:[%s5 + $0x98] sm:$0xf]
    %v1213 = vld [vmem:[%s5 + $0x9c] sm:$0xf]
    %v1214 = vld [vmem:[%s5 + $0xa0] sm:$0xf]
    %v1215 = vld [vmem:[%s5 + $0xa4] sm:$0xf]
    %v1216 = vld [vmem:[%s5 + $0xa8] sm:$0xf]
    %v1217 = vld [vmem:[%s5 + $0xac] sm:$0xf]
    %v1218 = vld [vmem:[%s5 + $0xb0] sm:$0xf]
    %v1219 = vld [vmem:[%s5 + $0xb4] sm:$0xf]
    %v1220 = vld [vmem:[%s5 + $0xb8] sm:$0xf]
    %v1221 = vld [vmem:[%s5 + $0xbc] sm:$0xf]
    %v1222 = vld [vmem:[%s5 + $0xc0] sm:$0xf]
    %v1223 = vld [vmem:[%s5 + $0xc4] sm:$0xf]
    %v1224 = vld [vmem:[%s5 + $0xc8] sm:$0xf]
    %v1225 = vld [vmem:[%s5 + $0xcc] sm:$0xf]
    %v1226 = vld [vmem:[%s5 + $0xd0] sm:$0xf]
    %v1227 = vld [vmem:[%s5 + $0xd4] sm:$0xf]
    %v1228 = vld [vmem:[%s5 + $0xd8] sm:$0xf]
    %v1229 = vld [vmem:[%s5 + $0xdc] sm:$0xf]
    %v1230 = vld [vmem:[%s5 + $0xe0] sm:$0xf]
    %v1231 = vld [vmem:[%s5 + $0xe4] sm:$0xf]
    %v1232 = vld [vmem:[%s5 + $0xe8] sm:$0xf]
    %v1233 = vld [vmem:[%s5 + $0xec] sm:$0xf]
    %v1234 = vld [vmem:[%s5 + $0xf0] sm:$0xf]
    %v1235 = vld [vmem:[%s5 + $0xf4] sm:$0xf]
    %v1236 = vld [vmem:[%s5 + $0xf8] sm:$0xf]
    %v1237 = vld [vmem:[%s5 + $0xfc] sm:$0xf]
    %v1238 = vld [vmem:[%s6] sm:$0x1]
    %v1240 = vlaneseq
    %v1241 = vshrl.u32 %v1240, 7
    %v1242 = vsub.s32 0, %v1241
    %v1243 = vrot.slane %v1238, %v1242
    %v1309 = vunpack.c.l.b16 %v1174
    %v1310 = vunpack.c.l.b16 %v1175
    %v1311 = vunpack.c.l.b16 %v1176
    %v1312 = vunpack.c.l.b16 %v1177
    %v1313 = vunpack.c.l.b16 %v1178
    %v1314 = vunpack.c.l.b16 %v1179
    %v1315 = vunpack.c.l.b16 %v1180
    %v1316 = vunpack.c.l.b16 %v1181
    %v1317 = vunpack.c.l.b16 %v1182
    %v1318 = vunpack.c.l.b16 %v1183
    %v1319 = vunpack.c.l.b16 %v1184
    %v1320 = vunpack.c.l.b16 %v1185
    %v1321 = vunpack.c.l.b16 %v1186
    %v1322 = vunpack.c.l.b16 %v1187
    %v1323 = vunpack.c.l.b16 %v1188
    %v1324 = vunpack.c.l.b16 %v1189
    %v1325 = vunpack.c.l.b16 %v1190
    %v1326 = vunpack.c.l.b16 %v1191
    %v1327 = vunpack.c.l.b16 %v1192
    %v1328 = vunpack.c.l.b16 %v1193
    %v1329 = vunpack.c.l.b16 %v1194
    %v1330 = vunpack.c.l.b16 %v1195
    %v1331 = vunpack.c.l.b16 %v1196
    %v1332 = vunpack.c.l.b16 %v1197
    %v1333 = vunpack.c.l.b16 %v1198
    %v1334 = vunpack.c.l.b16 %v1199
    %v1335 = vunpack.c.l.b16 %v1200
    %v1336 = vunpack.c.l.b16 %v1201
    %v1337 = vunpack.c.l.b16 %v1202
    %v1338 = vunpack.c.l.b16 %v1203
    %v1339 = vunpack.c.l.b16 %v1204
    %v1340 = vunpack.c.l.b16 %v1205
    %v1341 = vunpack.c.l.b16 %v1206
    %v1342 = vunpack.c.l.b16 %v1207
    %v1343 = vunpack.c.l.b16 %v1208
    %v1344 = vunpack.c.l.b16 %v1209
    %v1345 = vunpack.c.l.b16 %v1210
    %v1346 = vunpack.c.l.b16 %v1211
    %v1347 = vunpack.c.l.b16 %v1212
    %v1348 = vunpack.c.l.b16 %v1213
    %v1349 = vunpack.c.l.b16 %v1214
    %v1350 = vunpack.c.l.b16 %v1215
    %v1351 = vunpack.c.l.b16 %v1216
    %v1352 = vunpack.c.l.b16 %v1217
    %v1353 = vunpack.c.l.b16 %v1218
    %v1354 = vunpack.c.l.b16 %v1219
    %v1355 = vunpack.c.l.b16 %v1220
    %v1356 = vunpack.c.l.b16 %v1221
    %v1357 = vunpack.c.l.b16 %v1222
    %v1358 = vunpack.c.l.b16 %v1223
    %v1359 = vunpack.c.l.b16 %v1224
    %v1360 = vunpack.c.l.b16 %v1225
    %v1361 = vunpack.c.l.b16 %v1226
    %v1362 = vunpack.c.l.b16 %v1227
    %v1363 = vunpack.c.l.b16 %v1228
    %v1364 = vunpack.c.l.b16 %v1229
    %v1365 = vunpack.c.l.b16 %v1230
    %v1366 = vunpack.c.l.b16 %v1231
    %v1367 = vunpack.c.l.b16 %v1232
    %v1368 = vunpack.c.l.b16 %v1233
    %v1369 = vunpack.c.l.b16 %v1234
    %v1370 = vunpack.c.l.b16 %v1235
    %v1371 = vunpack.c.l.b16 %v1236
    %v1372 = vunpack.c.l.b16 %v1237
    %v1373 = vpack.c.b16 %v1310, %v1309
    %v1374 = vpack.c.b16 %v1312, %v1311
    %v1375 = vpack.c.b16 %v1314, %v1313
    %v1376 = vpack.c.b16 %v1316, %v1315
    %v1377 = vpack.c.b16 %v1318, %v1317
    %v1378 = vpack.c.b16 %v1320, %v1319
    %v1379 = vpack.c.b16 %v1322, %v1321
    %v1380 = vpack.c.b16 %v1324, %v1323
    %v1381 = vpack.c.b16 %v1326, %v1325
    %v1382 = vpack.c.b16 %v1328, %v1327
    %v1383 = vpack.c.b16 %v1330, %v1329
    %v1384 = vpack.c.b16 %v1332, %v1331
    %v1385 = vpack.c.b16 %v1334, %v1333
    %v1386 = vpack.c.b16 %v1336, %v1335
    %v1387 = vpack.c.b16 %v1338, %v1337
    %v1388 = vpack.c.b16 %v1340, %v1339
    %v1389 = vpack.c.b16 %v1342, %v1341
    %v1390 = vpack.c.b16 %v1344, %v1343
    %v1391 = vpack.c.b16 %v1346, %v1345
    %v1392 = vpack.c.b16 %v1348, %v1347
    %v1393 = vpack.c.b16 %v1350, %v1349
    %v1394 = vpack.c.b16 %v1352, %v1351
    %v1395 = vpack.c.b16 %v1354, %v1353
    %v1396 = vpack.c.b16 %v1356, %v1355
    %v1397 = vpack.c.b16 %v1358, %v1357
    %v1398 = vpack.c.b16 %v1360, %v1359
    %v1399 = vpack.c.b16 %v1362, %v1361
    %v1400 = vpack.c.b16 %v1364, %v1363
    %v1401 = vpack.c.b16 %v1366, %v1365
    %v1402 = vpack.c.b16 %v1368, %v1367
    %v1403 = vpack.c.b16 %v1370, %v1369
    %v1404 = vpack.c.b16 %v1372, %v1371
    %1437 = vmatprep.subr.bf16.mxu0 0
    %1438 = vmatpush1.bf16.msra.mxu0 %v1380
    %1439 = vmatprep.subr.bf16.mxu0 0
    %1440 = vmatpush1.bf16.msra.mxu0 %v1379
    %1441 = vmatprep.subr.bf16.mxu0 0
    %1442 = vmatpush1.bf16.msra.mxu0 %v1378
    %1443 = vmatprep.subr.bf16.mxu0 0
    %1444 = vmatpush1.bf16.msra.mxu0 %v1377
    %1445 = vmatprep.subr.bf16.mxu0 0
    %1446 = vmatpush1.bf16.msra.mxu0 %v1376
    %1447 = vmatprep.subr.bf16.mxu0 0
    %1448 = vmatpush1.bf16.msra.mxu0 %v1375
    %1449 = vmatprep.subr.bf16.mxu0 0
    %1450 = vmatpush1.bf16.msra.mxu0 %v1374
    %1451 = vmatprep.subr.bf16.mxu0 0
    %1452 = vmatpush1.bf16.msra.mxu0 %v1373
    %1453 = vmatprep.subr.bf16.mxu0 0
    %1454 = vmatpush2.bf16.msra.mxu0 %v1388
    %1455 = vmatprep.subr.bf16.mxu0 0
    %1456 = vmatpush2.bf16.msra.mxu0 %v1387
    %1457 = vmatprep.subr.bf16.mxu0 0
    %1458 = vmatpush2.bf16.msra.mxu0 %v1386
    %1459 = vmatprep.subr.bf16.mxu0 0
    %1460 = vmatpush2.bf16.msra.mxu0 %v1385
    %1461 = vmatprep.subr.bf16.mxu0 0
    %1462 = vmatpush2.bf16.msra.mxu0 %v1384
    %1463 = vmatprep.subr.bf16.mxu0 0
    %1464 = vmatpush2.bf16.msra.mxu0 %v1383
    %1465 = vmatprep.subr.bf16.mxu0 0
    %1466 = vmatpush2.bf16.msra.mxu0 %v1382
    %1467 = vmatprep.subr.bf16.mxu0 0
    %1468 = vmatpush2.bf16.msra.mxu0 %v1381
    %1469 = vmatprep.mubr.bf16.mxu0 %v1171
    %1470 = vmatmul.mubr.bf16.gmra.mxu0 %v1170
    %v1471 = vpop.f32.mrf.mxu0
    %v1472 = vadd.f32 %v1243, %v1471
    %v1473 = vpop.f32.mrf.mxu0
    %v1474 = vpop.f32.mrf.mxu0
    %v1475 = vadd.f32 %v1243, %v1474
    %v1476 = vpop.f32.mrf.mxu0
    %1477 = vdwg.mxu0
    %1478 = vmatprep.subr.bf16.mxu0 0
    %1479 = vmatpush1.bf16.msra.mxu0 %v1396
    %1480 = vmatprep.subr.bf16.mxu0 0
    %1481 = vmatpush1.bf16.msra.mxu0 %v1395
    %1482 = vmatprep.subr.bf16.mxu0 0
    %1483 = vmatpush1.bf16.msra.mxu0 %v1394
    %1484 = vmatprep.subr.bf16.mxu0 0
    %1485 = vmatpush1.bf16.msra.mxu0 %v1393
    %1486 = vmatprep.subr.bf16.mxu0 0
    %1487 = vmatpush1.bf16.msra.mxu0 %v1392
    %1488 = vmatprep.subr.bf16.mxu0 0
    %1489 = vmatpush1.bf16.msra.mxu0 %v1391
    %1490 = vmatprep.subr.bf16.mxu0 0
    %1491 = vmatpush1.bf16.msra.mxu0 %v1390
    %1492 = vmatprep.subr.bf16.mxu0 0
    %1493 = vmatpush1.bf16.msra.mxu0 %v1389
    %1494 = vmatprep.subr.bf16.mxu0 0
    %1495 = vmatpush2.bf16.msra.mxu0 %v1404
    %1496 = vmatprep.subr.bf16.mxu0 0
    %1497 = vmatpush2.bf16.msra.mxu0 %v1403
    %1498 = vmatprep.subr.bf16.mxu0 0
    %1499 = vmatpush2.bf16.msra.mxu0 %v1402
    %1500 = vmatprep.subr.bf16.mxu0 0
    %1501 = vmatpush2.bf16.msra.mxu0 %v1401
    %1502 = vmatprep.subr.bf16.mxu0 0
    %1503 = vmatpush2.bf16.msra.mxu0 %v1400
    %1504 = vmatprep.subr.bf16.mxu0 0
    %1505 = vmatpush2.bf16.msra.mxu0 %v1399
    %1506 = vmatprep.subr.bf16.mxu0 0
    %1507 = vmatpush2.bf16.msra.mxu0 %v1398
    %1508 = vmatprep.subr.bf16.mxu0 0
    %1509 = vmatpush2.bf16.msra.mxu0 %v1397
    %1510 = vmatprep.mubr.bf16.mxu0 %v1173
    %1511 = vmatmul.mubr.bf16.gmra.mxu0 %v1172
    %v1512 = vpop.f32.mrf.mxu0
    %v1513 = vadd.f32 %v1472, %v1512
    %v1514 = vpop.f32.mrf.mxu0
    %v1515 = vpop.f32.mrf.mxu0
    %v1516 = vadd.f32 %v1475, %v1515
    %v1517 = vpop.f32.mrf.mxu0
    %1518 = vdwg.mxu0
    %v1519 = vpack.c.bf16 %v1516, %v1513
    %v1521 = vunpack.c.l.b16 %v1519
    %v1522 = vunpack.c.h.b16 %v1519
    %v1523 = vpack.c.b16 %v1521, %v1521
    %v1524 = vpack.c.b16 %v1522, %v1522
    %1527 = vst [vmem:[%s7] sm:$0xf] %v1523
    %1528 = vst [vmem:[%s7 + $0x4] sm:$0xf] %v1524
    // Predicated region
    $region34: #{dqn_forward.1} parent=1 // pred_check
      _
    $region35: #{dqn_forward.1} parent=1 // pred_check_branch
      %1530 = sbr.rel (0) target = $region37
    $region36: #{dqn_forward.1} parent=1 // pred_region
      _
    $region37: #{dqn_forward.1} parent=1 // pred_fallthru
      _
    // Predicated region
    $region38: #{dqn_forward.1} parent=1 // pred_check
      _
    $region39: #{dqn_forward.1} parent=1 // pred_check_branch
      %1532 = sbr.rel (0) target = $region41
    $region40: #{dqn_forward.1} parent=1 // pred_region
      _
    $region41: #{dqn_forward.1} parent=1 // pred_fallthru
      _
    %1533 = vsyncpa [#allocation3], 1

</llo_original>
